<compile_context>
chip_gen: v7x
topology: tpu7x:2x2x1
jax: 0.10.0
libtpu: 0.0.40
codegen_flags: <defaults>
</compile_context>

<pallas_src>
import functools

import jax
import jax.numpy as jnp
from jax import lax
from jax.experimental import pallas as pl
from jax.experimental.pallas import tpu as pltpu


def _round_up(x, m):
    return ((x + m - 1) // m) * m


# ----------------------------------------------------------------------------
# Kernel: Linear->ReLU, Linear->ReLU, Linear (lane-dense transposed output)
# ----------------------------------------------------------------------------
def qnet_kernel(s_ref, a_ref, l_ref,
                w1s_ref, w1a_ref, w1l_ref, b1_ref,
                w2_ref, b2_ref,
                w3t_ref, b3_ref,
                o_ref, *, num_out):
    # layer 0: fused concat([state, action, lambdas]) @ W1 + b1, ReLU.
    # Concat is folded in by splitting W1 row-wise into three partial dots (f32,
    # tiny K -- negligible compute, avoids an extra HBM round trip for xu).
    h1 = jnp.dot(s_ref[...], w1s_ref[...], preferred_element_type=jnp.float32)
    h1 = h1 + jnp.dot(a_ref[...], w1a_ref[...], preferred_element_type=jnp.float32)
    h1 = h1 + jnp.dot(l_ref[...], w1l_ref[...], preferred_element_type=jnp.float32)
    h1 = jnp.maximum(h1 + b1_ref[...], 0.0)

    # hidden_layer1: Linear(256, 256) + ReLU  (bf16 MXU inputs, f32 accumulate)
    h2 = jnp.dot(h1.astype(jnp.bfloat16), w2_ref[...],
                 preferred_element_type=jnp.float32)
    h2 = jnp.maximum(h2 + b2_ref[...], 0.0)

    # output_layer: Linear(256, num_out) computed as W3^T (num_out,256) against
    # h2 (TILE_B,256) contracting the 256 axis -> (num_out, TILE_B): the store
    # is lane-dense (batch on lanes) instead of a 1-lane masked store.
    q = lax.dot_general(
        w3t_ref[...], h2.astype(jnp.bfloat16),
        dimension_numbers=(((1,), (1,)), ((), ())),
        preferred_element_type=jnp.float32)

    for r in range(num_out):                      # static, num_out is tiny
        o_ref[pl.ds(r, 1), :] = q[r:r + 1, :] + b3_ref[r]


# ----------------------------------------------------------------------------
# Wrapper
# ----------------------------------------------------------------------------
@functools.partial(jax.jit, static_argnames=("tile_b",))
def qnetwork_forward(state, action, lambdas, params, tile_b=256):
    """QNetwork forward (n_hidden=1). Returns (B, num_out)."""
    w1, b1, w2, b2, w3, b3 = params
    B = state.shape[0]
    ds, da, dl = state.shape[1], action.shape[1], lambdas.shape[1]
    hidden = w1.shape[1]
    num_out = w3.shape[1]

    # Batch tiling: TILE_B rows per grid step (>=256 for HBM-roofline at large B,
    # shrunk for tiny batches), batch padded to a multiple of the tile.
    tb = min(tile_b, _round_up(B, 8))
    b_pad = _round_up(B, tb)

    def pad_b(x):
        x = x.astype(jnp.float32)
        return jnp.pad(x, ((0, b_pad - B), (0, 0))) if b_pad != B else x

    s = pad_b(state)
    a = pad_b(action)
    l = pad_b(lambdas)

    # Fused concat: split W1 row-wise (kept f32 -- tiny K, negligible compute).
    w1s = w1[:ds]
    w1a = w1[ds:ds + da]
    w1l = w1[ds + da:]

    # bf16 weights for the MXU-heavy layers (f32 accumulation inside kernel).
    w2_bf = w2.astype(jnp.bfloat16)
    w3t_bf = w3.T.astype(jnp.bfloat16)                    # (num_out, hidden)
    b3_s = b3.reshape(num_out).astype(jnp.float32)        # scalar path (SMEM)

    resident = lambda i: (0, 0)        # weights/biases stay VMEM-resident
    batched = lambda i: (i, 0)         # activation tiles stream over the grid

    out_t = pl.pallas_call(
        functools.partial(qnet_kernel, num_out=num_out),
        out_shape=jax.ShapeDtypeStruct((num_out, b_pad), jnp.float32),
        grid=(b_pad // tb,),
        in_specs=[
            pl.BlockSpec((tb, ds), batched),
            pl.BlockSpec((tb, da), batched),
            pl.BlockSpec((tb, dl), batched),
            pl.BlockSpec((ds, hidden), resident),
            pl.BlockSpec((da, hidden), resident),
            pl.BlockSpec((dl, hidden), resident),
            pl.BlockSpec((1, hidden), resident),
            pl.BlockSpec((hidden, hidden), resident),
            pl.BlockSpec((1, hidden), resident),
            pl.BlockSpec((num_out, hidden), resident),
            pl.BlockSpec(memory_space=pltpu.MemorySpace.SMEM),   # b3 scalars
        ],
        out_specs=pl.BlockSpec((num_out, tb), lambda i: (0, i)),
        compiler_params=pltpu.CompilerParams(
            dimension_semantics=("parallel",)),
    )(s, a, l, w1s, w1a, w1l, b1, w2_bf, b2, w3t_bf, b3_s)

    # (num_out, B_pad) lane-dense kernel output -> (B, num_out)
    return out_t[:, :B].T


# ----------------------------------------------------------------------------
# Deterministic parameter init (PyTorch nn.Linear default: U(-1/sqrt(fan_in), +))
# ----------------------------------------------------------------------------
def init_params(key, d_in, d_hidden=256, d_out=1):
    ks = jax.random.split(key, 6)

    def linear(kw, kb, fan_in, fan_out):
        bound = 1.0 / jnp.sqrt(fan_in)
        w = jax.random.uniform(kw, (fan_in, fan_out), jnp.float32, -bound, bound)
        b = jax.random.uniform(kb, (1, fan_out), jnp.float32, -bound, bound)
        return w, b

    w1, b1 = linear(ks[0], ks[1], d_in, d_hidden)
    w2, b2 = linear(ks[2], ks[3], d_hidden, d_hidden)
    w3, b3 = linear(ks[4], ks[5], d_hidden, d_out)
    return (w1, b1, w2, b2, w3, b3)


if __name__ == "__main__":
    B = 8
    state_dim, action_dim, lambda_dim = 10, 4, 2
    d_in = state_dim + action_dim + lambda_dim  # num_inputs + num_actions = 16

    key = jax.random.PRNGKey(0)
    k_s, k_a, k_l, k_p = jax.random.split(key, 4)

    state = jax.random.normal(k_s, (B, state_dim), jnp.float32)
    action = jax.random.normal(k_a, (B, action_dim), jnp.float32)
    lambdas = jax.random.normal(k_l, (B, lambda_dim), jnp.float32)

    params = init_params(k_p, d_in)

    out = qnetwork_forward(state, action, lambdas, params)
    out = jax.block_until_ready(out)

    # ---- references ----
    w1, b1, w2, b2, w3, b3 = params
    xu = jnp.concatenate([state, action, lambdas], axis=1)

    # matched-precision reference (bf16 weights on layers 2/3, f32 accumulate)
    h1 = jnp.maximum(xu @ w1 + b1, 0.0)
    h2 = jnp.maximum(
        jnp.dot(h1.astype(jnp.bfloat16), w2.astype(jnp.bfloat16),
                preferred_element_type=jnp.float32) + b2, 0.0)
    ref = jnp.dot(h2.astype(jnp.bfloat16), w3.astype(jnp.bfloat16),
                  preferred_element_type=jnp.float32) + b3

    # full-f32 reference (looser tolerance: bf16 MXU inputs in the kernel)
    h1f = jnp.maximum(xu @ w1 + b1, 0.0)
    h2f = jnp.maximum(h1f @ w2 + b2, 0.0)
    ref_f32 = h2f @ w3 + b3

    assert out.shape == (B, 1), out.shape
    assert jnp.allclose(out, ref, atol=1e-2, rtol=1e-2)
    assert jnp.allclose(out, ref_f32, atol=5e-2, rtol=5e-2)

    print("KERNEL_OK")
</pallas_src>

<mosaic_0001>
module attributes {stable_mosaic.version = 11 : i64} {
  func.func @qnet_kernel(%arg0: i32, %arg1: memref<8x10xf32, #tpu.memory_space<vmem>>, %arg2: memref<8x4xf32, #tpu.memory_space<vmem>>, %arg3: memref<8x2xf32, #tpu.memory_space<vmem>>, %arg4: memref<10x256xf32, #tpu.memory_space<vmem>>, %arg5: memref<4x256xf32, #tpu.memory_space<vmem>>, %arg6: memref<2x256xf32, #tpu.memory_space<vmem>>, %arg7: memref<1x256xf32, #tpu.memory_space<vmem>>, %arg8: memref<256x256xbf16, #tpu.memory_space<vmem>>, %arg9: memref<1x256xf32, #tpu.memory_space<vmem>>, %arg10: memref<1x256xbf16, #tpu.memory_space<vmem>>, %arg11: memref<1xf32, #tpu.memory_space<smem>>, %arg12: memref<1x8xf32, #tpu.memory_space<vmem>>) attributes {dimension_semantics = [#tpu.dimension_semantics<parallel>], iteration_bounds = array<i64: 1>, scalar_prefetch = 0 : i64, scratch_operands = 0 : i64, tpu.core_type = #tpu.core_type<tc>, window_params = [{transform_indices = @transform_0, window_bounds = array<i64: 8, 10>}, {transform_indices = @transform_1, window_bounds = array<i64: 8, 4>}, {transform_indices = @transform_2, window_bounds = array<i64: 8, 2>}, {pipeline_mode = #tpu.pipeline_mode<synchronous>, transform_indices = @transform_3, window_bounds = array<i64: 10, 256>}, {pipeline_mode = #tpu.pipeline_mode<synchronous>, transform_indices = @transform_4, window_bounds = array<i64: 4, 256>}, {pipeline_mode = #tpu.pipeline_mode<synchronous>, transform_indices = @transform_5, window_bounds = array<i64: 2, 256>}, {pipeline_mode = #tpu.pipeline_mode<synchronous>, transform_indices = @transform_6, window_bounds = array<i64: 1, 256>}, {pipeline_mode = #tpu.pipeline_mode<synchronous>, transform_indices = @transform_7, window_bounds = array<i64: 256, 256>}, {pipeline_mode = #tpu.pipeline_mode<synchronous>, transform_indices = @transform_8, window_bounds = array<i64: 1, 256>}, {pipeline_mode = #tpu.pipeline_mode<synchronous>, transform_indices = @transform_9, window_bounds = array<i64: 1, 256>}, {transform_indices = @transform_10, window_bounds = array<i64: 1>}, {transform_indices = @transform_11, window_bounds = array<i64: 1, 8>}]} {
    %c0 = arith.constant 0 : index
    %c0_0 = arith.constant 0 : index
    %0 = vector.load %arg1[%c0, %c0_0] : memref<8x10xf32, #tpu.memory_space<vmem>>, vector<8x10xf32>
    %c0_1 = arith.constant 0 : index
    %c0_2 = arith.constant 0 : index
    %1 = vector.load %arg4[%c0_1, %c0_2] : memref<10x256xf32, #tpu.memory_space<vmem>>, vector<10x256xf32>
    %cst = arith.constant dense<0.000000e+00> : vector<8x256xf32>
    %2 = tpu.matmul %0, %1, %cst {dimension_numbers = #tpu.dot_dimension_numbers<[1], [0], [0], [1], [0, 0, 1, 1], [], []>} : vector<8x10xf32>, vector<10x256xf32>, vector<8x256xf32> -> vector<8x256xf32>
    %c0_3 = arith.constant 0 : index
    %c0_4 = arith.constant 0 : index
    %3 = vector.load %arg2[%c0_3, %c0_4] : memref<8x4xf32, #tpu.memory_space<vmem>>, vector<8x4xf32>
    %c0_5 = arith.constant 0 : index
    %c0_6 = arith.constant 0 : index
    %4 = vector.load %arg5[%c0_5, %c0_6] : memref<4x256xf32, #tpu.memory_space<vmem>>, vector<4x256xf32>
    %cst_7 = arith.constant dense<0.000000e+00> : vector<8x256xf32>
    %5 = tpu.matmul %3, %4, %cst_7 {dimension_numbers = #tpu.dot_dimension_numbers<[1], [0], [0], [1], [0, 0, 1, 1], [], []>} : vector<8x4xf32>, vector<4x256xf32>, vector<8x256xf32> -> vector<8x256xf32>
    %6 = arith.addf %2, %5 : vector<8x256xf32>
    %c0_8 = arith.constant 0 : index
    %c0_9 = arith.constant 0 : index
    %7 = vector.load %arg3[%c0_8, %c0_9] : memref<8x2xf32, #tpu.memory_space<vmem>>, vector<8x2xf32>
    %c0_10 = arith.constant 0 : index
    %c0_11 = arith.constant 0 : index
    %8 = vector.load %arg6[%c0_10, %c0_11] : memref<2x256xf32, #tpu.memory_space<vmem>>, vector<2x256xf32>
    %cst_12 = arith.constant dense<0.000000e+00> : vector<8x256xf32>
    %9 = tpu.matmul %7, %8, %cst_12 {dimension_numbers = #tpu.dot_dimension_numbers<[1], [0], [0], [1], [0, 0, 1, 1], [], []>} : vector<8x2xf32>, vector<2x256xf32>, vector<8x256xf32> -> vector<8x256xf32>
    %10 = arith.addf %6, %9 : vector<8x256xf32>
    %c0_13 = arith.constant 0 : index
    %c0_14 = arith.constant 0 : index
    %11 = vector.load %arg7[%c0_13, %c0_14] : memref<1x256xf32, #tpu.memory_space<vmem>>, vector<1x256xf32>
    %12 = vector.broadcast %11 : vector<1x256xf32> to vector<8x256xf32>
    %13 = arith.addf %10, %12 : vector<8x256xf32>
    %cst_15 = arith.constant 0.000000e+00 : f32
    %14 = vector.broadcast %cst_15 : f32 to vector<8x256xf32>
    %15 = arith.maximumf %13, %14 : vector<8x256xf32>
    %16 = arith.truncf %15 : vector<8x256xf32> to vector<8x256xbf16>
    %c0_16 = arith.constant 0 : index
    %c0_17 = arith.constant 0 : index
    %17 = vector.load %arg8[%c0_16, %c0_17] : memref<256x256xbf16, #tpu.memory_space<vmem>>, vector<256x256xbf16>
    %cst_18 = arith.constant dense<0.000000e+00> : vector<8x256xf32>
    %18 = tpu.matmul %16, %17, %cst_18 {dimension_numbers = #tpu.dot_dimension_numbers<[1], [0], [0], [1], [0, 0, 1, 1], [], []>} : vector<8x256xbf16>, vector<256x256xbf16>, vector<8x256xf32> -> vector<8x256xf32>
    %c0_19 = arith.constant 0 : index
    %c0_20 = arith.constant 0 : index
    %19 = vector.load %arg9[%c0_19, %c0_20] : memref<1x256xf32, #tpu.memory_space<vmem>>, vector<1x256xf32>
    %20 = vector.broadcast %19 : vector<1x256xf32> to vector<8x256xf32>
    %21 = arith.addf %18, %20 : vector<8x256xf32>
    %cst_21 = arith.constant 0.000000e+00 : f32
    %22 = vector.broadcast %cst_21 : f32 to vector<8x256xf32>
    %23 = arith.maximumf %21, %22 : vector<8x256xf32>
    %c0_22 = arith.constant 0 : index
    %c0_23 = arith.constant 0 : index
    %24 = vector.load %arg10[%c0_22, %c0_23] : memref<1x256xbf16, #tpu.memory_space<vmem>>, vector<1x256xbf16>
    %25 = arith.truncf %23 : vector<8x256xf32> to vector<8x256xbf16>
    %cst_24 = arith.constant dense<0.000000e+00> : vector<1x8xf32>
    %26 = tpu.matmul %24, %25, %cst_24 {dimension_numbers = #tpu.dot_dimension_numbers<[1], [1], [0], [0], [0, 0, 1, 0], [], []>} : vector<1x256xbf16>, vector<8x256xbf16>, vector<1x8xf32> -> vector<1x8xf32>
    %c0_25 = arith.constant 0 : index
    %27 = memref.load %arg11[%c0_25] : memref<1xf32, #tpu.memory_space<smem>>
    %28 = vector.broadcast %27 : f32 to vector<1x8xf32>
    %29 = arith.addf %26, %28 : vector<1x8xf32>
    %c0_26 = arith.constant 0 : index
    %c0_27 = arith.constant 0 : index
    %30 = vector.load %arg12[%c0_26, %c0_27] : memref<1x8xf32, #tpu.memory_space<vmem>>, vector<1x8xf32>
    tpu.vector_store %arg12[%c0_26, %c0_27], %29 {strides = array<i32>} : memref<1x8xf32, #tpu.memory_space<vmem>>, vector<1x8xf32>,
    return
  }
  func.func @transform_0(%arg0: i32) -> (i32, i32) {
    %c0_i32 = arith.constant 0 : i32
    %c0_i32_0 = arith.constant 0 : i32
    return %arg0, %c0_i32 : i32, i32
  }
  func.func @transform_1(%arg0: i32) -> (i32, i32) {
    %c0_i32 = arith.constant 0 : i32
    %c0_i32_0 = arith.constant 0 : i32
    return %arg0, %c0_i32 : i32, i32
  }
  func.func @transform_2(%arg0: i32) -> (i32, i32) {
    %c0_i32 = arith.constant 0 : i32
    %c0_i32_0 = arith.constant 0 : i32
    return %arg0, %c0_i32 : i32, i32
  }
  func.func @transform_3(%arg0: i32) -> (i32, i32) {
    %c0_i32 = arith.constant 0 : i32
    %c0_i32_0 = arith.constant 0 : i32
    %c0_i32_1 = arith.constant 0 : i32
    return %c0_i32, %c0_i32_0 : i32, i32
  }
  func.func @transform_4(%arg0: i32) -> (i32, i32) {
    %c0_i32 = arith.constant 0 : i32
    %c0_i32_0 = arith.constant 0 : i32
    %c0_i32_1 = arith.constant 0 : i32
    return %c0_i32, %c0_i32_0 : i32, i32
  }
  func.func @transform_5(%arg0: i32) -> (i32, i32) {
    %c0_i32 = arith.constant 0 : i32
    %c0_i32_0 = arith.constant 0 : i32
    %c0_i32_1 = arith.constant 0 : i32
    return %c0_i32, %c0_i32_0 : i32, i32
  }
  func.func @transform_6(%arg0: i32) -> (i32, i32) {
    %c0_i32 = arith.constant 0 : i32
    %c0_i32_0 = arith.constant 0 : i32
    %c0_i32_1 = arith.constant 0 : i32
    return %c0_i32, %c0_i32_0 : i32, i32
  }
  func.func @transform_7(%arg0: i32) -> (i32, i32) {
    %c0_i32 = arith.constant 0 : i32
    %c0_i32_0 = arith.constant 0 : i32
    %c0_i32_1 = arith.constant 0 : i32
    return %c0_i32, %c0_i32_0 : i32, i32
  }
  func.func @transform_8(%arg0: i32) -> (i32, i32) {
    %c0_i32 = arith.constant 0 : i32
    %c0_i32_0 = arith.constant 0 : i32
    %c0_i32_1 = arith.constant 0 : i32
    return %c0_i32, %c0_i32_0 : i32, i32
  }
  func.func @transform_9(%arg0: i32) -> (i32, i32) {
    %c0_i32 = arith.constant 0 : i32
    %c0_i32_0 = arith.constant 0 : i32
    %c0_i32_1 = arith.constant 0 : i32
    return %c0_i32, %c0_i32_0 : i32, i32
  }
  func.func @transform_10(%arg0: i32) -> i32 {
    %c0_i32 = arith.constant 0 : i32
    %c0_i32_0 = arith.constant 0 : i32
    return %c0_i32 : i32
  }
  func.func @transform_11(%arg0: i32) -> (i32, i32) {
    %c0_i32 = arith.constant 0 : i32
    %c0_i32_0 = arith.constant 0 : i32
    return %c0_i32, %arg0 : i32, i32
  }
}

</mosaic_0001>

<llo_original>
// kernel: qnetwork_forward.1
$region0: #{qnetwork_forward.1}
  #allocation0 [shape = 'u32[]', space=smem, size = 0x4, offset = 0x4, fixed_abs, tag = 'smem constant byte address 0x4 - core index']
  #allocation1 [shape = 'u32[144,128]{1,0:T(1,128)}', space=vmem, size = 0x12000, scoped, tag = 'internal scratch']
  #allocation2 [shape = 'f32[1]{0:T(128)S(6)}', space=smem, size = 0x200, scoped, tag = 'scoped memory for qnetwork_forward.1']
  %s0 = inlined_call_operand.vmem [shape: f32[8,10], index: 0, kind: input, shape index: {}]
  %s1 = inlined_call_operand.vmem [shape: f32[8,4], index: 1, kind: input, shape index: {}]
  %s2 = inlined_call_operand.vmem [shape: f32[8,2], index: 2, kind: input, shape index: {}]
  %s3 = inlined_call_operand.vmem [shape: f32[10,256], index: 3, kind: input, shape index: {}]
  %s4 = inlined_call_operand.vmem [shape: f32[4,256], index: 4, kind: input, shape index: {}]
  %s5 = inlined_call_operand.vmem [shape: f32[2,256], index: 5, kind: input, shape index: {}]
  %s6 = inlined_call_operand.vmem [shape: f32[1,256], index: 6, kind: input, shape index: {}]
  %s7 = inlined_call_operand.vmem [shape: bf16[256,256], index: 7, kind: input, shape index: {}]
  %s8 = inlined_call_operand.vmem [shape: f32[1,256], index: 8, kind: input, shape index: {}]
  %s9 = inlined_call_operand.vmem [shape: bf16[1,256], index: 9, kind: input, shape index: {}]
  %s10 = inlined_call_operand.<no memory space> [shape: f32[1], index: 10, kind: input, shape index: {}]
  %s11 = inlined_call_operand.hbm [shape: f32[1,8], index: 11, kind: output, shape index: {}]
  %s12 = sld [smem:[#allocation0]]
  $region54: #{qnetwork_forward.1} parent=0
    _
  %s14 = ssub.s32 1, %s12
  %s15 = scalar_select 0, %s14, %s12
  %16 = sst [smem:[#allocation2]] %s10
  $region1: #{qnetwork_forward.1} parent=0
    #allocation3 [shape = 'u8[512]{0}', space=vmem, size = 0x400, scoped, tag = 'output window, operand 0, single buffered']
    #allocation4 [shape = 's32[1]{0}', space=sflag, size = 0x4, scoped, tag = 'scoped memory for qnetwork_forward.1']
    %17 = vsyncpa [#allocation4], 0
    // Predicated region
    $region2: #{qnetwork_forward.1} parent=1 // pred_check
      _
    $region3: #{qnetwork_forward.1} parent=1 // pred_check_branch
      %19 = sbr.rel (0) target = $region5
    $region4: #{qnetwork_forward.1} parent=1 // pred_region
      _
    $region5: #{qnetwork_forward.1} parent=1 // pred_fallthru
      _
    // Predicated region
    $region6: #{qnetwork_forward.1} parent=1 // pred_check
      _
    $region7: #{qnetwork_forward.1} parent=1 // pred_check_branch
      %21 = sbr.rel (0) target = $region9
    $region8: #{qnetwork_forward.1} parent=1 // pred_region
      _
    $region9: #{qnetwork_forward.1} parent=1 // pred_fallthru
      _
    // Predicated region
    $region10: #{qnetwork_forward.1} parent=1 // pred_check
      _
    $region11: #{qnetwork_forward.1} parent=1 // pred_check_branch
      %23 = sbr.rel (0) target = $region13
    $region12: #{qnetwork_forward.1} parent=1 // pred_region
      _
    $region13: #{qnetwork_forward.1} parent=1 // pred_fallthru
      _
    // Predicated region
    $region14: #{qnetwork_forward.1} parent=1 // pred_check
      _
    $region15: #{qnetwork_forward.1} parent=1 // pred_check_branch
      %25 = sbr.rel (0) target = $region17
    $region16: #{qnetwork_forward.1} parent=1 // pred_region
      _
    $region17: #{qnetwork_forward.1} parent=1 // pred_fallthru
      _
    // Predicated region
    $region18: #{qnetwork_forward.1} parent=1 // pred_check
      _
    $region19: #{qnetwork_forward.1} parent=1 // pred_check_branch
      %27 = sbr.rel (0) target = $region21
    $region20: #{qnetwork_forward.1} parent=1 // pred_region
      _
    $region21: #{qnetwork_forward.1} parent=1 // pred_fallthru
      _
    // Predicated region
    $region22: #{qnetwork_forward.1} parent=1 // pred_check
      _
    $region23: #{qnetwork_forward.1} parent=1 // pred_check_branch
      %29 = sbr.rel (0) target = $region25
    $region24: #{qnetwork_forward.1} parent=1 // pred_region
      _
    $region25: #{qnetwork_forward.1} parent=1 // pred_fallthru
      _
    // Predicated region
    $region26: #{qnetwork_forward.1} parent=1 // pred_check
      _
    $region27: #{qnetwork_forward.1} parent=1 // pred_check_branch
      %31 = sbr.rel (0) target = $region29
    $region28: #{qnetwork_forward.1} parent=1 // pred_region
      _
    $region29: #{qnetwork_forward.1} parent=1 // pred_fallthru
      _
    // Predicated region
    $region30: #{qnetwork_forward.1} parent=1 // pred_check
      _
    $region31: #{qnetwork_forward.1} parent=1 // pred_check_branch
      %33 = sbr.rel (0) target = $region33
    $region32: #{qnetwork_forward.1} parent=1 // pred_region
      _
    $region33: #{qnetwork_forward.1} parent=1 // pred_fallthru
      _
    // Predicated region
    $region34: #{qnetwork_forward.1} parent=1 // pred_check
      _
    $region35: #{qnetwork_forward.1} parent=1 // pred_check_branch
      %35 = sbr.rel (0) target = $region37
    $region36: #{qnetwork_forward.1} parent=1 // pred_region
      _
    $region37: #{qnetwork_forward.1} parent=1 // pred_fallthru
      _
    // Predicated region
    $region38: #{qnetwork_forward.1} parent=1 // pred_check
      _
    $region39: #{qnetwork_forward.1} parent=1 // pred_check_branch
      %37 = sbr.rel (0) target = $region41
    $region40: #{qnetwork_forward.1} parent=1 // pred_region
      _
    $region41: #{qnetwork_forward.1} parent=1 // pred_fallthru
      _
    // Predicated region
    $region42: #{qnetwork_forward.1} parent=1 // pred_check
      _
    $region43: #{qnetwork_forward.1} parent=1 // pred_check_branch
      %39 = sbr.rel (0) target = $region45
    $region44: #{qnetwork_forward.1} parent=1 // pred_region
      _
    $region45: #{qnetwork_forward.1} parent=1 // pred_fallthru
      _
    %v41 = vld [vmem:[%s0] sm:$0xff]
    %v42 = vld [vmem:[%s3] sm:$0xff]
    %v43 = vld [vmem:[%s3 + $0x8] sm:$0xff]
    %v44 = vld [vmem:[%s3 + $0x10] sm:$0x3]
    %v45 = vld [vmem:[%s3 + $0x18] sm:$0x3]
    %v46 = vld [vmem:[%s1] sm:$0xff]
    %v47 = vld [vmem:[%s4] sm:$0xff]
    %v49 = vcombine.high %v47, %v47
    %vm50 = vcmask 31744
    %v52 = vsel %vm50, %v46, 0
    %vm54 = vcmask 1043456
    %v55 = vsel %vm54, %v47, 0
    %v57 = vsel %vm54, %v49, 0
    %59 = vmatprep.subr.mxu0 %v57
    %60 = vmatpush1.msra.mxu0 %v55
    %61 = vmatprep.subr.mxu0 0.0
    %62 = vmatpush1.msra.mxu0 0.0
    %63 = vmatprep.subr.mxu0 0.0
    %64 = vmatpush1.msra.mxu0 0.0
    %65 = vmatprep.subr.mxu0 0.0
    %66 = vmatpush1.msra.mxu0 0.0
    %67 = vmatprep.subr.mxu0 0.0
    %68 = vmatpush1.msra.mxu0 0.0
    %69 = vmatprep.subr.mxu0 0.0
    %70 = vmatpush1.msra.mxu0 0.0
    %71 = vmatprep.subr.mxu0 0.0
    %72 = vmatpush1.msra.mxu0 0.0
    %73 = vmatprep.subr.mxu0 0.0
    %74 = vmatpush1.msra.mxu0 0.0
    %75 = vmatprep.subr.mxu0 0.0
    %76 = vmatpush1.msra.mxu0 0.0
    %77 = vmatprep.subr.mxu0 0.0
    %78 = vmatpush1.msra.mxu0 0.0
    %79 = vmatprep.subr.mxu0 0.0
    %80 = vmatpush1.msra.mxu0 0.0
    %81 = vmatprep.subr.mxu0 0.0
    %82 = vmatpush1.msra.mxu0 0.0
    %83 = vmatprep.subr.mxu0 0.0
    %84 = vmatpush1.msra.mxu0 0.0
    %85 = vmatprep.subr.mxu0 0.0
    %86 = vmatpush1.msra.mxu0 0.0
    %87 = vmatprep.subr.mxu0 0.0
    %88 = vmatpush1.msra.mxu0 0.0
    %89 = vmatprep.subr.mxu0 0.0
    %90 = vmatpush1.msra.mxu0 0.0
    %91 = vmatprep.subr.mxu0 0.0
    %92 = vmatpush1.msra.mxu0 0.0
    %93 = vmatprep.subr.mxu0 0.0
    %94 = vmatpush1.msra.mxu0 0.0
    %95 = vmatprep.subr.mxu0 0.0
    %96 = vmatpush1.msra.mxu0 0.0
    %97 = vmatprep.subr.mxu0 0.0
    %98 = vmatpush1.msra.mxu0 0.0
    %99 = vmatprep.subr.mxu0 0.0
    %100 = vmatpush1.msra.mxu0 0.0
    %101 = vmatprep.subr.mxu0 0.0
    %102 = vmatpush1.msra.mxu0 0.0
    %103 = vmatprep.subr.mxu0 0.0
    %104 = vmatpush1.msra.mxu0 0.0
    %105 = vmatprep.subr.mxu0 0.0
    %106 = vmatpush1.msra.mxu0 0.0
    %107 = vmatprep.subr.mxu0 0.0
    %108 = vmatpush1.msra.mxu0 0.0
    %109 = vmatprep.subr.mxu0 0.0
    %110 = vmatpush1.msra.mxu0 0.0
    %111 = vmatprep.subr.mxu0 0.0
    %112 = vmatpush1.msra.mxu0 0.0
    %113 = vmatprep.subr.mxu0 0.0
    %114 = vmatpush1.msra.mxu0 0.0
    %115 = vmatprep.subr.mxu0 0.0
    %116 = vmatpush1.msra.mxu0 0.0
    %117 = vmatprep.subr.mxu0 0.0
    %118 = vmatpush1.msra.mxu0 0.0
    %119 = vmatprep.subr.mxu0 0.0
    %120 = vmatpush1.msra.mxu0 0.0
    %121 = vmatprep.subr.mxu0 0.0
    %122 = vmatpush1.msra.mxu0 0.0
    %123 = vmatprep.mubr.f32.mxu0 0.0
    %124 = vmatmul.mubr.f32.gmra.mrb[0].mxu0 %v52
    %v125 = vpop.f32.mrb[0].mxu0
    %v126 = vadd.f32 0.0, %v125
    %v127 = vpop.f32.mrb[0].mxu0
    %v128 = vadd.f32 0.0, %v127
    %129 = vdwg.mxu0
    %vm130 = vcmask 80896
    %v132 = vsel %vm130, %v41, 0
    %vm134 = vcmask 1041408
    %v136 = vsel %vm134, %v44, 0
    %v139 = vsel %vm134, %v45, 0
    %141 = vmatprep.subr.mxu0 %v43
    %142 = vmatpush1.msra.mxu0 %v42
    %143 = vmatprep.subr.mxu0 %v139
    %144 = vmatpush1.msra.mxu0 %v136
    %145 = vmatprep.subr.mxu0 0.0
    %146 = vmatpush1.msra.mxu0 0.0
    %147 = vmatprep.subr.mxu0 0.0
    %148 = vmatpush1.msra.mxu0 0.0
    %149 = vmatprep.subr.mxu0 0.0
    %150 = vmatpush1.msra.mxu0 0.0
    %151 = vmatprep.subr.mxu0 0.0
    %152 = vmatpush1.msra.mxu0 0.0
    %153 = vmatprep.subr.mxu0 0.0
    %154 = vmatpush1.msra.mxu0 0.0
    %155 = vmatprep.subr.mxu0 0.0
    %156 = vmatpush1.msra.mxu0 0.0
    %157 = vmatprep.subr.mxu0 0.0
    %158 = vmatpush1.msra.mxu0 0.0
    %159 = vmatprep.subr.mxu0 0.0
    %160 = vmatpush1.msra.mxu0 0.0
    %161 = vmatprep.subr.mxu0 0.0
    %162 = vmatpush1.msra.mxu0 0.0
    %163 = vmatprep.subr.mxu0 0.0
    %164 = vmatpush1.msra.mxu0 0.0
    %165 = vmatprep.subr.mxu0 0.0
    %166 = vmatpush1.msra.mxu0 0.0
    %167 = vmatprep.subr.mxu0 0.0
    %168 = vmatpush1.msra.mxu0 0.0
    %169 = vmatprep.subr.mxu0 0.0
    %170 = vmatpush1.msra.mxu0 0.0
    %171 = vmatprep.subr.mxu0 0.0
    %172 = vmatpush1.msra.mxu0 0.0
    %173 = vmatprep.subr.mxu0 0.0
    %174 = vmatpush1.msra.mxu0 0.0
    %175 = vmatprep.subr.mxu0 0.0
    %176 = vmatpush1.msra.mxu0 0.0
    %177 = vmatprep.subr.mxu0 0.0
    %178 = vmatpush1.msra.mxu0 0.0
    %179 = vmatprep.subr.mxu0 0.0
    %180 = vmatpush1.msra.mxu0 0.0
    %181 = vmatprep.subr.mxu0 0.0
    %182 = vmatpush1.msra.mxu0 0.0
    %183 = vmatprep.subr.mxu0 0.0
    %184 = vmatpush1.msra.mxu0 0.0
    %185 = vmatprep.subr.mxu0 0.0
    %186 = vmatpush1.msra.mxu0 0.0
    %187 = vmatprep.subr.mxu0 0.0
    %188 = vmatpush1.msra.mxu0 0.0
    %189 = vmatprep.subr.mxu0 0.0
    %190 = vmatpush1.msra.mxu0 0.0
    %191 = vmatprep.subr.mxu0 0.0
    %192 = vmatpush1.msra.mxu0 0.0
    %193 = vmatprep.subr.mxu0 0.0
    %194 = vmatpush1.msra.mxu0 0.0
    %195 = vmatprep.subr.mxu0 0.0
    %196 = vmatpush1.msra.mxu0 0.0
    %197 = vmatprep.subr.mxu0 0.0
    %198 = vmatpush1.msra.mxu0 0.0
    %199 = vmatprep.subr.mxu0 0.0
    %200 = vmatpush1.msra.mxu0 0.0
    %201 = vmatprep.subr.mxu0 0.0
    %202 = vmatpush1.msra.mxu0 0.0
    %203 = vmatprep.subr.mxu0 0.0
    %204 = vmatpush1.msra.mxu0 0.0
    %205 = vmatprep.mubr.f32.mxu0 0.0
    %206 = vmatmul.mubr.f32.gmra.mrb[0].mxu0 %v132
    %v207 = vpop.f32.mrb[0].mxu0
    %v208 = vadd.f32 %v126, %v207
    %v209 = vpop.f32.mrb[0].mxu0
    %v210 = vadd.f32 %v128, %v209
    %211 = vdwg.mxu0
    %v212 = vld [vmem:[%s2] sm:$0xff]
    %v213 = vld [vmem:[%s5] sm:$0xf]
    %v216 = vunpack.c.l.s4 1983009808
    %v217 = vunpack.c.0.s8 %v216
    %v218 = vlaneseq
    %v219 = vshrl.u32 %v218, 7
    %v220 = vsub.s32 %v217, %v219
    %v221 = vrot.slane %v213, %v220
    %v222 = vcombine.high %v221, %v221
    %vm223 = vcmask 15360
    %v225 = vsel %vm223, %v212, 0
    %v227 = vsel %vm134, %v221, 0
    %v229 = vsel %vm134, %v222, 0
    %231 = vmatprep.subr.mxu0 %v229
    %232 = vmatpush1.msra.mxu0 %v227
    %233 = vmatprep.subr.mxu0 0.0
    %234 = vmatpush1.msra.mxu0 0.0
    %235 = vmatprep.subr.mxu0 0.0
    %236 = vmatpush1.msra.mxu0 0.0
    %237 = vmatprep.subr.mxu0 0.0
    %238 = vmatpush1.msra.mxu0 0.0
    %239 = vmatprep.subr.mxu0 0.0
    %240 = vmatpush1.msra.mxu0 0.0
    %241 = vmatprep.subr.mxu0 0.0
    %242 = vmatpush1.msra.mxu0 0.0
    %243 = vmatprep.subr.mxu0 0.0
    %244 = vmatpush1.msra.mxu0 0.0
    %245 = vmatprep.subr.mxu0 0.0
    %246 = vmatpush1.msra.mxu0 0.0
    %247 = vmatprep.subr.mxu0 0.0
    %248 = vmatpush1.msra.mxu0 0.0
    %249 = vmatprep.subr.mxu0 0.0
    %250 = vmatpush1.msra.mxu0 0.0
    %251 = vmatprep.subr.mxu0 0.0
    %252 = vmatpush1.msra.mxu0 0.0
    %253 = vmatprep.subr.mxu0 0.0
    %254 = vmatpush1.msra.mxu0 0.0
    %255 = vmatprep.subr.mxu0 0.0
    %256 = vmatpush1.msra.mxu0 0.0
    %257 = vmatprep.subr.mxu0 0.0
    %258 = vmatpush1.msra.mxu0 0.0
    %259 = vmatprep.subr.mxu0 0.0
    %260 = vmatpush1.msra.mxu0 0.0
    %261 = vmatprep.subr.mxu0 0.0
    %262 = vmatpush1.msra.mxu0 0.0
    %263 = vmatprep.subr.mxu0 0.0
    %264 = vmatpush1.msra.mxu0 0.0
    %265 = vmatprep.subr.mxu0 0.0
    %266 = vmatpush1.msra.mxu0 0.0
    %267 = vmatprep.subr.mxu0 0.0
    %268 = vmatpush1.msra.mxu0 0.0
    %269 = vmatprep.subr.mxu0 0.0
    %270 = vmatpush1.msra.mxu0 0.0
    %271 = vmatprep.subr.mxu0 0.0
    %272 = vmatpush1.msra.mxu0 0.0
    %273 = vmatprep.subr.mxu0 0.0
    %274 = vmatpush1.msra.mxu0 0.0
    %275 = vmatprep.subr.mxu0 0.0
    %276 = vmatpush1.msra.mxu0 0.0
    %277 = vmatprep.subr.mxu0 0.0
    %278 = vmatpush1.msra.mxu0 0.0
    %279 = vmatprep.subr.mxu0 0.0
    %280 = vmatpush1.msra.mxu0 0.0
    %281 = vmatprep.subr.mxu0 0.0
    %282 = vmatpush1.msra.mxu0 0.0
    %283 = vmatprep.subr.mxu0 0.0
    %284 = vmatpush1.msra.mxu0 0.0
    %285 = vmatprep.subr.mxu0 0.0
    %286 = vmatpush1.msra.mxu0 0.0
    %287 = vmatprep.subr.mxu0 0.0
    %288 = vmatpush1.msra.mxu0 0.0
    %289 = vmatprep.subr.mxu0 0.0
    %290 = vmatpush1.msra.mxu0 0.0
    %291 = vmatprep.subr.mxu0 0.0
    %292 = vmatpush1.msra.mxu0 0.0
    %293 = vmatprep.subr.mxu0 0.0
    %294 = vmatpush1.msra.mxu0 0.0
    %295 = vmatprep.mubr.f32.mxu0 0.0
    %296 = vmatmul.mubr.f32.gmra.mrb[0].mxu0 %v225
    %v297 = vpop.f32.mrb[0].mxu0
    %v298 = vadd.f32 0.0, %v297
    %v299 = vpop.f32.mrb[0].mxu0
    %v300 = vadd.f32 0.0, %v299
    %301 = vdwg.mxu0
    %v302 = vadd.f32 %v208, %v298
    %v303 = vadd.f32 %v210, %v300
    %v304 = vld [vmem:[%s6] sm:$0x3]
    %v306 = vlaneseq
    %v307 = vshrl.u32 %v306, 7
    %v308 = vsub.s32 0, %v307
    %v309 = vrot.slane %v304, %v308
    %v310 = vlaneseq
    %v311 = vshrl.u32 %v310, 7
    %v312 = vsub.s32 1, %v311
    %v313 = vrot.slane %v304, %v312
    %v316 = vadd.f32 %v302, %v309
    %v317 = vadd.f32 %v303, %v313
    %v318 = vmax.f32 %v316, 0.0
    %v319 = vmax.f32 %v317, 0.0
    %v320 = vpack.c.bf16 %v318, %v318
    %v321 = vpack.c.bf16 %v319, %v319
    %v322 = vld [vmem:[%s7] sm:$0xff]
    %v323 = vld [vmem:[%s7 + $0x8] sm:$0xff]
    %v324 = vld [vmem:[%s7 + $0x10] sm:$0xff]
    %v325 = vld [vmem:[%s7 + $0x18] sm:$0xff]
    %v326 = vld [vmem:[%s7 + $0x20] sm:$0xff]
    %v327 = vld [vmem:[%s7 + $0x28] sm:$0xff]
    %v328 = vld [vmem:[%s7 + $0x30] sm:$0xff]
    %v329 = vld [vmem:[%s7 + $0x38] sm:$0xff]
    %v330 = vld [vmem:[%s7 + $0x40] sm:$0xff]
    %v331 = vld [vmem:[%s7 + $0x48] sm:$0xff]
    %v332 = vld [vmem:[%s7 + $0x50] sm:$0xff]
    %v333 = vld [vmem:[%s7 + $0x58] sm:$0xff]
    %v334 = vld [vmem:[%s7 + $0x60] sm:$0xff]
    %v335 = vld [vmem:[%s7 + $0x68] sm:$0xff]
    %v336 = vld [vmem:[%s7 + $0x70] sm:$0xff]
    %v337 = vld [vmem:[%s7 + $0x78] sm:$0xff]
    %v338 = vld [vmem:[%s7 + $0x80] sm:$0xff]
    %v339 = vld [vmem:[%s7 + $0x88] sm:$0xff]
    %v340 = vld [vmem:[%s7 + $0x90] sm:$0xff]
    %v341 = vld [vmem:[%s7 + $0x98] sm:$0xff]
    %v342 = vld [vmem:[%s7 + $0xa0] sm:$0xff]
    %v343 = vld [vmem:[%s7 + $0xa8] sm:$0xff]
    %v344 = vld [vmem:[%s7 + $0xb0] sm:$0xff]
    %v345 = vld [vmem:[%s7 + $0xb8] sm:$0xff]
    %v346 = vld [vmem:[%s7 + $0xc0] sm:$0xff]
    %v347 = vld [vmem:[%s7 + $0xc8] sm:$0xff]
    %v348 = vld [vmem:[%s7 + $0xd0] sm:$0xff]
    %v349 = vld [vmem:[%s7 + $0xd8] sm:$0xff]
    %v350 = vld [vmem:[%s7 + $0xe0] sm:$0xff]
    %v351 = vld [vmem:[%s7 + $0xe8] sm:$0xff]
    %v352 = vld [vmem:[%s7 + $0xf0] sm:$0xff]
    %v353 = vld [vmem:[%s7 + $0xf8] sm:$0xff]
    %v354 = vld [vmem:[%s8] sm:$0x3]
    %v356 = vlaneseq
    %v357 = vshrl.u32 %v356, 7
    %v358 = vsub.s32 0, %v357
    %v359 = vrot.slane %v354, %v358
    %v360 = vlaneseq
    %v361 = vshrl.u32 %v360, 7
    %v362 = vsub.s32 1, %v361
    %v363 = vrot.slane %v354, %v362
    %v398 = vunpack.c.l.b16 %v322
    %v399 = vunpack.c.h.b16 %v322
    %v400 = vunpack.c.l.b16 %v323
    %v401 = vunpack.c.h.b16 %v323
    %v402 = vunpack.c.l.b16 %v324
    %v403 = vunpack.c.h.b16 %v324
    %v404 = vunpack.c.l.b16 %v325
    %v405 = vunpack.c.h.b16 %v325
    %v406 = vunpack.c.l.b16 %v326
    %v407 = vunpack.c.h.b16 %v326
    %v408 = vunpack.c.l.b16 %v327
    %v409 = vunpack.c.h.b16 %v327
    %v410 = vunpack.c.l.b16 %v328
    %v411 = vunpack.c.h.b16 %v328
    %v412 = vunpack.c.l.b16 %v329
    %v413 = vunpack.c.h.b16 %v329
    %v414 = vunpack.c.l.b16 %v330
    %v415 = vunpack.c.h.b16 %v330
    %v416 = vunpack.c.l.b16 %v331
    %v417 = vunpack.c.h.b16 %v331
    %v418 = vunpack.c.l.b16 %v332
    %v419 = vunpack.c.h.b16 %v332
    %v420 = vunpack.c.l.b16 %v333
    %v421 = vunpack.c.h.b16 %v333
    %v422 = vunpack.c.l.b16 %v334
    %v423 = vunpack.c.h.b16 %v334
    %v424 = vunpack.c.l.b16 %v335
    %v425 = vunpack.c.h.b16 %v335
    %v426 = vunpack.c.l.b16 %v336
    %v427 = vunpack.c.h.b16 %v336
    %v428 = vunpack.c.l.b16 %v337
    %v429 = vunpack.c.h.b16 %v337
    %v430 = vunpack.c.l.b16 %v338
    %v431 = vunpack.c.h.b16 %v338
    %v432 = vunpack.c.l.b16 %v339
    %v433 = vunpack.c.h.b16 %v339
    %v434 = vunpack.c.l.b16 %v340
    %v435 = vunpack.c.h.b16 %v340
    %v436 = vunpack.c.l.b16 %v341
    %v437 = vunpack.c.h.b16 %v341
    %v438 = vunpack.c.l.b16 %v342
    %v439 = vunpack.c.h.b16 %v342
    %v440 = vunpack.c.l.b16 %v343
    %v441 = vunpack.c.h.b16 %v343
    %v442 = vunpack.c.l.b16 %v344
    %v443 = vunpack.c.h.b16 %v344
    %v444 = vunpack.c.l.b16 %v345
    %v445 = vunpack.c.h.b16 %v345
    %v446 = vunpack.c.l.b16 %v346
    %v447 = vunpack.c.h.b16 %v346
    %v448 = vunpack.c.l.b16 %v347
    %v449 = vunpack.c.h.b16 %v347
    %v450 = vunpack.c.l.b16 %v348
    %v451 = vunpack.c.h.b16 %v348
    %v452 = vunpack.c.l.b16 %v349
    %v453 = vunpack.c.h.b16 %v349
    %v454 = vunpack.c.l.b16 %v350
    %v455 = vunpack.c.h.b16 %v350
    %v456 = vunpack.c.l.b16 %v351
    %v457 = vunpack.c.h.b16 %v351
    %v458 = vunpack.c.l.b16 %v352
    %v459 = vunpack.c.h.b16 %v352
    %v460 = vunpack.c.l.b16 %v353
    %v461 = vunpack.c.h.b16 %v353
    %v462 = vpack.c.b16 %v400, %v398
    %v463 = vpack.c.b16 %v401, %v399
    %v464 = vpack.c.b16 %v404, %v402
    %v465 = vpack.c.b16 %v405, %v403
    %v466 = vpack.c.b16 %v408, %v406
    %v467 = vpack.c.b16 %v409, %v407
    %v468 = vpack.c.b16 %v412, %v410
    %v469 = vpack.c.b16 %v413, %v411
    %v470 = vpack.c.b16 %v416, %v414
    %v471 = vpack.c.b16 %v417, %v415
    %v472 = vpack.c.b16 %v420, %v418
    %v473 = vpack.c.b16 %v421, %v419
    %v474 = vpack.c.b16 %v424, %v422
    %v475 = vpack.c.b16 %v425, %v423
    %v476 = vpack.c.b16 %v428, %v426
    %v477 = vpack.c.b16 %v429, %v427
    %v478 = vpack.c.b16 %v432, %v430
    %v479 = vpack.c.b16 %v433, %v431
    %v480 = vpack.c.b16 %v436, %v434
    %v481 = vpack.c.b16 %v437, %v435
    %v482 = vpack.c.b16 %v440, %v438
    %v483 = vpack.c.b16 %v441, %v439
    %v484 = vpack.c.b16 %v444, %v442
    %v485 = vpack.c.b16 %v445, %v443
    %v486 = vpack.c.b16 %v448, %v446
    %v487 = vpack.c.b16 %v449, %v447
    %v488 = vpack.c.b16 %v452, %v450
    %v489 = vpack.c.b16 %v453, %v451
    %v490 = vpack.c.b16 %v456, %v454
    %v491 = vpack.c.b16 %v457, %v455
    %v492 = vpack.c.b16 %v460, %v458
    %v493 = vpack.c.b16 %v461, %v459
    %526 = vmatprep.subr.bf16.mxu0 %v463
    %527 = vmatpush1.bf16.msra.mxu0 %v462
    %528 = vmatprep.subr.bf16.mxu0 %v465
    %529 = vmatpush1.bf16.msra.mxu0 %v464
    %530 = vmatprep.subr.bf16.mxu0 %v467
    %531 = vmatpush1.bf16.msra.mxu0 %v466
    %532 = vmatprep.subr.bf16.mxu0 %v469
    %533 = vmatpush1.bf16.msra.mxu0 %v468
    %534 = vmatprep.subr.bf16.mxu0 %v471
    %535 = vmatpush1.bf16.msra.mxu0 %v470
    %536 = vmatprep.subr.bf16.mxu0 %v473
    %537 = vmatpush1.bf16.msra.mxu0 %v472
    %538 = vmatprep.subr.bf16.mxu0 %v475
    %539 = vmatpush1.bf16.msra.mxu0 %v474
    %540 = vmatprep.subr.bf16.mxu0 %v477
    %541 = vmatpush1.bf16.msra.mxu0 %v476
    %542 = vmatprep.subr.bf16.mxu0 %v479
    %543 = vmatpush1.bf16.msra.mxu0 %v478
    %544 = vmatprep.subr.bf16.mxu0 %v481
    %545 = vmatpush1.bf16.msra.mxu0 %v480
    %546 = vmatprep.subr.bf16.mxu0 %v483
    %547 = vmatpush1.bf16.msra.mxu0 %v482
    %548 = vmatprep.subr.bf16.mxu0 %v485
    %549 = vmatpush1.bf16.msra.mxu0 %v484
    %550 = vmatprep.subr.bf16.mxu0 %v487
    %551 = vmatpush1.bf16.msra.mxu0 %v486
    %552 = vmatprep.subr.bf16.mxu0 %v489
    %553 = vmatpush1.bf16.msra.mxu0 %v488
    %554 = vmatprep.subr.bf16.mxu0 %v491
    %555 = vmatpush1.bf16.msra.mxu0 %v490
    %556 = vmatprep.subr.bf16.mxu0 %v493
    %557 = vmatpush1.bf16.msra.mxu0 %v492
    %558 = vmatprep.mubr.bf16.mxu0 %v321
    %559 = vmatmul.mubr.bf16.gmra.mrb[0].mxu0 %v320
    %v560 = vpop.f32.mrb[0].mxu0
    %v561 = vadd.f32 %v359, %v560
    %v562 = vpop.f32.mrb[0].mxu0
    %v563 = vadd.f32 %v363, %v562
    %v564 = vpop.f32.mrb[0].mxu0
    %v565 = vpop.f32.mrb[0].mxu0
    %566 = vdwg.mxu0
    %v567 = vmax.f32 %v561, 0.0
    %v568 = vmax.f32 %v563, 0.0
    %v569 = vld [vmem:[%s9] sm:$0x3]
    %v570 = vpack.c.bf16 %v567, %v567
    %v571 = vpack.c.bf16 %v568, %v568
    %s572 = sld [smem:[#allocation2]]
    %v573 = vstv %s572
    %v576 = vunpack.c.l.s4 1966171168
    %v577 = vunpack.c.0.s8 %v576
    %v578 = vlaneseq
    %v579 = vshrl.u32 %v578, 7
    %v580 = vsub.s32 %v577, %v579
    %v581 = vrot.slane %v569, %v580
    %v582 = vcombine.high %v581, %v581
    %v584 = vunpack.c.l.s4 1966171168
    %v585 = vunpack.c.0.s8 %v584
    %v586 = vlaneseq
    %v587 = vshrl.u32 %v586, 7
    %v588 = vsub.s32 %v585, %v587
    %v589 = vrot.slane %v581, %v588
    %v591 = vunpack.c.l.s4 1966171168
    %v592 = vunpack.c.0.s8 %v591
    %v593 = vlaneseq
    %v594 = vshrl.u32 %v593, 7
    %v595 = vsub.s32 %v592, %v594
    %v596 = vrot.slane %v582, %v595
    %599 = vmatprep.subr.bf16.mxu0 %v571
    %600 = vmatpush1.bf16.xpose.msra.mxu0 %v570
    %601 = vmatprep.subr.bf16.mxu0 0
    %602 = vmatpush1.bf16.xpose.msra.mxu0 0
    %603 = vmatprep.subr.bf16.mxu0 0
    %604 = vmatpush1.bf16.xpose.msra.mxu0 0
    %605 = vmatprep.subr.bf16.mxu0 0
    %606 = vmatpush1.bf16.xpose.msra.mxu0 0
    %607 = vmatprep.subr.bf16.mxu0 0
    %608 = vmatpush1.bf16.xpose.msra.mxu0 0
    %609 = vmatprep.subr.bf16.mxu0 0
    %610 = vmatpush1.bf16.xpose.msra.mxu0 0
    %611 = vmatprep.subr.bf16.mxu0 0
    %612 = vmatpush1.bf16.xpose.msra.mxu0 0
    %613 = vmatprep.subr.bf16.mxu0 0
    %614 = vmatpush1.bf16.xpose.msra.mxu0 0
    %615 = vmatprep.subr.bf16.mxu0 0
    %616 = vmatpush1.bf16.xpose.msra.mxu0 0
    %617 = vmatprep.subr.bf16.mxu0 0
    %618 = vmatpush1.bf16.xpose.msra.mxu0 0
    %619 = vmatprep.subr.bf16.mxu0 0
    %620 = vmatpush1.bf16.xpose.msra.mxu0 0
    %621 = vmatprep.subr.bf16.mxu0 0
    %622 = vmatpush1.bf16.xpose.msra.mxu0 0
    %623 = vmatprep.subr.bf16.mxu0 0
    %624 = vmatpush1.bf16.xpose.msra.mxu0 0
    %625 = vmatprep.subr.bf16.mxu0 0
    %626 = vmatpush1.bf16.xpose.msra.mxu0 0
    %627 = vmatprep.subr.bf16.mxu0 0
    %628 = vmatpush1.bf16.xpose.msra.mxu0 0
    %629 = vmatprep.subr.bf16.mxu0 0
    %630 = vmatpush1.bf16.xpose.msra.mxu0 0
    %631 = vmatprep.mubr.bf16.mxu0 %v596
    %632 = vmatmul.mubr.bf16.gmra.mrb[0].mxu0 %v589
    %v633 = vpop.f32.mrb[0].mxu0
    %v634 = vadd.f32 %v573, %v633
    %v635 = vpop.f32.mrb[0].mxu0
    %v636 = vpop.f32.mrb[0].mxu0
    %v637 = vpop.f32.mrb[0].mxu0
    %638 = vdwg.mxu0
    %vm639 = vcmask 57344
    %640 = vst.msk [vmem:[#allocation3] sm:$0x1] %vm639, %v634
    // Predicated region
    $region46: #{qnetwork_forward.1} parent=1 // pred_check
      _
    $region47: #{qnetwork_forward.1} parent=1 // pred_check_branch
      %642 = sbr.rel (0) target = $region49
    $region48: #{qnetwork_forward.1} parent=1 // pred_region
      %s644 = ssub.s32 16, 16
      %645 = vsyncadd [#allocation4], %s644
      %s647 = sshll.u32 [#allocation3], 4
      %s648 = int_to_ptr.vmem [resolvable:$true] %s647
      %650 = dma.vmem_to_hbm [thread:$0]  %s648, 16, %s11, [#allocation4]
    $region49: #{qnetwork_forward.1} parent=1 // pred_fallthru
      _
    // Predicated region
    $region50: #{qnetwork_forward.1} parent=1 // pred_check
      _
    $region51: #{qnetwork_forward.1} parent=1 // pred_check_branch
      %652 = sbr.rel (0) target = $region53
    $region52: #{qnetwork_forward.1} parent=1 // pred_region
      %653 = dma.done [#allocation4], 16
    $region53: #{qnetwork_forward.1} parent=1 // pred_fallthru
      _
    %654 = vsyncpa [#allocation4], 1

</llo_original>
